<compile_context>
chip_gen: v5e
topology: v5e:2x2
jax: 0.10.0
libtpu: 0.0.40
codegen_flags: <defaults>
</compile_context>

<pallas_src>
import functools

import jax
import jax.numpy as jnp
from jax.experimental import pallas as pl
from jax.experimental.pallas import tpu as pltpu


def _round_up(a, b):
    return -(-a // b) * b


def _maxpool3x3s2_kernel(x_ref, o_ref, *, ho, wo):
    # x_ref block: (tn, 2, 2, Ho+1, Wo+1, tc) — channels-last 2x2 polyphase of the padded
    # input:  x_ref[n, a, b, ih, iw, c] == xpad[2*ih + a, 2*iw + b] for batch/channel (n, c).
    # o_ref block: (tn, Ho, Wo, tc).
    #
    # out[i, j] = max_{dh,dw in {0,1,2}} xpad[2*i + dh, 2*j + dw]
    #   dh = 2*hs + ph  ->  row-parity plane ph, row shift hs inside that plane
    #   dw = 2*ws + pw  ->  col-parity plane pw, col shift ws
    acc = None
    for a in (0, 1, 2):
        ph, hs = a % 2, a // 2
        for b in (0, 1, 2):
            pw, ws = b % 2, b // 2
            # Unit-stride static slice straight off the ref: only acc + this tap are live.
            t = x_ref[:, ph, pw, hs:hs + ho, ws:ws + wo, :]
            acc = t if acc is None else jnp.maximum(acc, t)
    o_ref[...] = acc.astype(o_ref.dtype)


def down_max_pool_forward(x_nchw):
    """MaxPool2d(kernel_size=3, stride=2, padding=1) forward (NCHW in / NCHW out)."""
    N, C, H, W = x_nchw.shape
    dtype = x_nchw.dtype
    itemsize = jnp.dtype(dtype).itemsize

    Ho = (H - 1) // 2 + 1
    Wo = (W - 1) // 2 + 1
    Hh, Wh = Ho + 1, Wo + 1          # polyphase plane extents
    Hp, Wp = 2 * Hh, 2 * Wh          # padded spatial extents (>= H+2 / W+2, even)

    neg = -jnp.inf if jnp.issubdtype(dtype, jnp.floating) else jnp.iinfo(dtype).min

    # --- single fused prep pass: pad (PyTorch -inf padding semantics) -> free dim-split
    #     reshape -> one transpose to the channels-last 2x2-polyphase layout. ---
    xp = jnp.pad(x_nchw, ((0, 0), (0, 0), (1, Hp - H - 1), (1, Wp - W - 1)),
                 constant_values=neg)
    xq = xp.reshape(N, C, Hh, 2, Wh, 2).transpose(0, 3, 5, 2, 4, 1)   # (N, 2, 2, Hh, Wh, C)

    # --- tile selection against a per-generation VMEM budget (layout-padded sizes). ---
    def in_block_bytes(tn, tc):
        return tn * 4 * Hh * _round_up(Wh, 8) * _round_up(tc, 128) * itemsize

    def out_block_bytes(tn, tc):
        return tn * Ho * _round_up(Wo, 8) * _round_up(tc, 128) * itemsize

    def working_set(tn, tc):
        return 2 * (in_block_bytes(tn, tc) + out_block_bytes(tn, tc))   # double-buffered

    try:
        vmem_cap = int(pltpu.get_tpu_info().vmem_capacity_bytes)
    except Exception:
        vmem_cap = 64 * 1024 * 1024        # conservative (v7x per-TC figure)
    budget = min(24 * 1024 * 1024, vmem_cap // 3)

    # Channel tile: keep full C (halo-free axis) unless that alone exceeds the budget and
    # C splits cleanly into 128-lane tiles.
    tc = C
    if working_set(1, C) > budget and C % 128 == 0 and C > 128:
        tc = 128

    # Batch tile: biggest that fits, but keep >= 2 grid steps whenever N >= 2 so the DMA
    # pipeline has overlap work and both v7x TensorCores get blocks.
    tn = 1
    for cand in range(1, N + 1):
        if working_set(cand, tc) <= budget:
            tn = cand
    if N >= 2:
        tn = min(tn, -(-N // 2))
    grid = (pl.cdiv(N, tn), C // tc)

    vmem_limit = int(min(max(2 * working_set(tn, tc), 32 * 1024 * 1024),
                         (3 * vmem_cap) // 4))

    cost = pl.CostEstimate(
        flops=8 * N * C * Ho * Wo,                                   # 8 max-compares / output
        transcendentals=0,
        bytes_accessed=(N * C * (Hp * Wp + Ho * Wo)) * itemsize,     # true single-pass traffic
    )

    out_nhwc = pl.pallas_call(
        functools.partial(_maxpool3x3s2_kernel, ho=Ho, wo=Wo),
        out_shape=jax.ShapeDtypeStruct((N, Ho, Wo, C), dtype),
        grid=grid,
        in_specs=[pl.BlockSpec((tn, 2, 2, Hh, Wh, tc),
                               lambda n, c: (n, 0, 0, 0, 0, c))],
        out_specs=pl.BlockSpec((tn, Ho, Wo, tc), lambda n, c: (n, 0, 0, c)),
        compiler_params=pltpu.CompilerParams(
            dimension_semantics=("parallel", "parallel"),
            vmem_limit_bytes=vmem_limit),
        cost_estimate=cost,
    )(xq)

    return out_nhwc.transpose(0, 3, 1, 2)


def reference_forward(x):
    """Pure-JAX reference of PyTorch MaxPool2d(3, stride=2, padding=1)."""
    return jax.lax.reduce_window(
        x, -jnp.inf, jax.lax.max,
        window_dimensions=(1, 1, 3, 3),
        window_strides=(1, 1, 2, 2),
        padding=((0, 0), (0, 0), (1, 1), (1, 1)))


if __name__ == "__main__":
    key = jax.random.PRNGKey(0)
    N, C, H, W = 2, 4, 16, 16
    x = jax.random.normal(key, (N, C, H, W), jnp.float32)

    out = down_max_pool_forward(x)
    out = jax.block_until_ready(out)

    ref = reference_forward(x)
    assert out.shape == ref.shape == (N, C, (H - 1) // 2 + 1, (W - 1) // 2 + 1), \
        (out.shape, ref.shape)
    max_err = float(jnp.max(jnp.abs(out - ref)))
    assert max_err < 1e-6, f"max_err={max_err}"

    print("KERNEL_OK")
</pallas_src>

<mosaic_0001>
module attributes {stable_mosaic.version = 11 : i64} {
  func.func @_maxpool3x3s2_kernel(%arg0: i32, %arg1: i32, %arg2: memref<1x2x2x9x9x4xf32, #tpu.memory_space<vmem>>, %arg3: memref<1x8x8x4xf32, #tpu.memory_space<vmem>>) attributes {dimension_semantics = [#tpu.dimension_semantics<parallel>, #tpu.dimension_semantics<parallel>], iteration_bounds = array<i64: 2, 1>, scalar_prefetch = 0 : i64, scratch_operands = 0 : i64, tpu.core_type = #tpu.core_type<tc>, window_params = [{transform_indices = @transform_0, window_bounds = array<i64: 1, 2, 2, 9, 9, 4>}, {transform_indices = @transform_1, window_bounds = array<i64: 1, 8, 8, 4>}]} {
    %c0 = arith.constant 0 : index
    %c0_0 = arith.constant 0 : index
    %c0_1 = arith.constant 0 : index
    %c0_2 = arith.constant 0 : index
    %c0_3 = arith.constant 0 : index
    %c0_4 = arith.constant 0 : index
    %0 = vector.load %arg2[%c0, %c0_0, %c0_1, %c0_2, %c0_3, %c0_4] : memref<1x2x2x9x9x4xf32, #tpu.memory_space<vmem>>, vector<1x1x1x8x8x4xf32>
    %1 = vector.shape_cast %0 : vector<1x1x1x8x8x4xf32> to vector<1x8x8x4xf32>
    %c0_5 = arith.constant 0 : index
    %c0_6 = arith.constant 0 : index
    %c1 = arith.constant 1 : index
    %c0_7 = arith.constant 0 : index
    %c0_8 = arith.constant 0 : index
    %c0_9 = arith.constant 0 : index
    %2 = vector.load %arg2[%c0_5, %c0_6, %c1, %c0_7, %c0_8, %c0_9] : memref<1x2x2x9x9x4xf32, #tpu.memory_space<vmem>>, vector<1x1x1x8x8x4xf32>
    %3 = vector.shape_cast %2 : vector<1x1x1x8x8x4xf32> to vector<1x8x8x4xf32>
    %4 = arith.maximumf %1, %3 : vector<1x8x8x4xf32>
    %c0_10 = arith.constant 0 : index
    %c0_11 = arith.constant 0 : index
    %c0_12 = arith.constant 0 : index
    %c0_13 = arith.constant 0 : index
    %c1_14 = arith.constant 1 : index
    %c0_15 = arith.constant 0 : index
    %5 = vector.load %arg2[%c0_10, %c0_11, %c0_12, %c0_13, %c1_14, %c0_15] : memref<1x2x2x9x9x4xf32, #tpu.memory_space<vmem>>, vector<1x1x1x8x8x4xf32>
    %6 = vector.shape_cast %5 : vector<1x1x1x8x8x4xf32> to vector<1x8x8x4xf32>
    %7 = arith.maximumf %4, %6 : vector<1x8x8x4xf32>
    %c0_16 = arith.constant 0 : index
    %c1_17 = arith.constant 1 : index
    %c0_18 = arith.constant 0 : index
    %c0_19 = arith.constant 0 : index
    %c0_20 = arith.constant 0 : index
    %c0_21 = arith.constant 0 : index
    %8 = vector.load %arg2[%c0_16, %c1_17, %c0_18, %c0_19, %c0_20, %c0_21] : memref<1x2x2x9x9x4xf32, #tpu.memory_space<vmem>>, vector<1x1x1x8x8x4xf32>
    %9 = vector.shape_cast %8 : vector<1x1x1x8x8x4xf32> to vector<1x8x8x4xf32>
    %10 = arith.maximumf %7, %9 : vector<1x8x8x4xf32>
    %c0_22 = arith.constant 0 : index
    %c1_23 = arith.constant 1 : index
    %c1_24 = arith.constant 1 : index
    %c0_25 = arith.constant 0 : index
    %c0_26 = arith.constant 0 : index
    %c0_27 = arith.constant 0 : index
    %11 = vector.load %arg2[%c0_22, %c1_23, %c1_24, %c0_25, %c0_26, %c0_27] : memref<1x2x2x9x9x4xf32, #tpu.memory_space<vmem>>, vector<1x1x1x8x8x4xf32>
    %12 = vector.shape_cast %11 : vector<1x1x1x8x8x4xf32> to vector<1x8x8x4xf32>
    %13 = arith.maximumf %10, %12 : vector<1x8x8x4xf32>
    %c0_28 = arith.constant 0 : index
    %c1_29 = arith.constant 1 : index
    %c0_30 = arith.constant 0 : index
    %c0_31 = arith.constant 0 : index
    %c1_32 = arith.constant 1 : index
    %c0_33 = arith.constant 0 : index
    %14 = vector.load %arg2[%c0_28, %c1_29, %c0_30, %c0_31, %c1_32, %c0_33] : memref<1x2x2x9x9x4xf32, #tpu.memory_space<vmem>>, vector<1x1x1x8x8x4xf32>
    %15 = vector.shape_cast %14 : vector<1x1x1x8x8x4xf32> to vector<1x8x8x4xf32>
    %16 = arith.maximumf %13, %15 : vector<1x8x8x4xf32>
    %c0_34 = arith.constant 0 : index
    %c0_35 = arith.constant 0 : index
    %c0_36 = arith.constant 0 : index
    %c1_37 = arith.constant 1 : index
    %c0_38 = arith.constant 0 : index
    %c0_39 = arith.constant 0 : index
    %17 = vector.load %arg2[%c0_34, %c0_35, %c0_36, %c1_37, %c0_38, %c0_39] : memref<1x2x2x9x9x4xf32, #tpu.memory_space<vmem>>, vector<1x1x1x8x8x4xf32>
    %18 = vector.shape_cast %17 : vector<1x1x1x8x8x4xf32> to vector<1x8x8x4xf32>
    %19 = arith.maximumf %16, %18 : vector<1x8x8x4xf32>
    %c0_40 = arith.constant 0 : index
    %c0_41 = arith.constant 0 : index
    %c1_42 = arith.constant 1 : index
    %c1_43 = arith.constant 1 : index
    %c0_44 = arith.constant 0 : index
    %c0_45 = arith.constant 0 : index
    %20 = vector.load %arg2[%c0_40, %c0_41, %c1_42, %c1_43, %c0_44, %c0_45] : memref<1x2x2x9x9x4xf32, #tpu.memory_space<vmem>>, vector<1x1x1x8x8x4xf32>
    %21 = vector.shape_cast %20 : vector<1x1x1x8x8x4xf32> to vector<1x8x8x4xf32>
    %22 = arith.maximumf %19, %21 : vector<1x8x8x4xf32>
    %c0_46 = arith.constant 0 : index
    %c0_47 = arith.constant 0 : index
    %c0_48 = arith.constant 0 : index
    %c1_49 = arith.constant 1 : index
    %c1_50 = arith.constant 1 : index
    %c0_51 = arith.constant 0 : index
    %23 = vector.load %arg2[%c0_46, %c0_47, %c0_48, %c1_49, %c1_50, %c0_51] : memref<1x2x2x9x9x4xf32, #tpu.memory_space<vmem>>, vector<1x1x1x8x8x4xf32>
    %24 = vector.shape_cast %23 : vector<1x1x1x8x8x4xf32> to vector<1x8x8x4xf32>
    %25 = arith.maximumf %22, %24 : vector<1x8x8x4xf32>
    %c0_52 = arith.constant 0 : index
    %c0_53 = arith.constant 0 : index
    %c0_54 = arith.constant 0 : index
    %c0_55 = arith.constant 0 : index
    %26 = vector.load %arg3[%c0_52, %c0_53, %c0_54, %c0_55] : memref<1x8x8x4xf32, #tpu.memory_space<vmem>>, vector<1x8x8x4xf32>
    tpu.vector_store %arg3[%c0_52, %c0_53, %c0_54, %c0_55], %25 {strides = array<i32>} : memref<1x8x8x4xf32, #tpu.memory_space<vmem>>, vector<1x8x8x4xf32>,
    return
  }
  func.func @transform_0(%arg0: i32, %arg1: i32) -> (i32, i32, i32, i32, i32, i32) {
    %c0_i32 = arith.constant 0 : i32
    %c0_i32_0 = arith.constant 0 : i32
    %c0_i32_1 = arith.constant 0 : i32
    %c0_i32_2 = arith.constant 0 : i32
    %c0_i32_3 = arith.constant 0 : i32
    return %arg0, %c0_i32, %c0_i32_0, %c0_i32_1, %c0_i32_2, %arg1 : i32, i32, i32, i32, i32, i32
  }
  func.func @transform_1(%arg0: i32, %arg1: i32) -> (i32, i32, i32, i32) {
    %c0_i32 = arith.constant 0 : i32
    %c0_i32_0 = arith.constant 0 : i32
    %c0_i32_1 = arith.constant 0 : i32
    return %arg0, %c0_i32, %c0_i32_0, %arg1 : i32, i32, i32, i32
  }
}

</mosaic_0001>

<llo_original>
// kernel: tpu_custom_call.1
$region0: #{tpu_custom_call.1}
  #allocation0 [shape = 'u32[]', space=smem, size = 0x4, offset = 0x4, fixed_abs, tag = 'smem constant byte address 0x4 - core index']
  #allocation1 [shape = 'u32[72,128]{1,0:T(1,128)}', space=vmem, size = 0x9000, scoped, tag = 'internal scratch']
  %s0 = inlined_call_operand.vmem [shape: f32[2,2,2,9,9,4], index: 0, kind: input, shape index: {}]
  %s1 = inlined_call_operand.vmem [shape: f32[2,8,8,4], index: 1, kind: output, shape index: {}]
  %s2 = sld [smem:[#allocation0]]
  $region37: #{tpu_custom_call.1} parent=0
    _
  %s4 = ssub.s32 1, %s2
  %s5 = scalar_select 0, %s4, %s2
  loop: start=0, step=1, limit=4
  $region2: #{tpu_custom_call.1} parent=0 // loop_pre_header
    _
  $region3: #{tpu_custom_call.1} parent=0 // loop_header
    %s7 = sphi 0, %s11
    %p8 = scmp.ge.s32.totalorder %s7, 4
    %s14 = sphi 0, %s26
    %s15 = sphi 0, %s22
    %s16 = sphi 0, %s14
    %s17 = sphi 0, %s15
    %s18 = sphi 0, %s16
    %s19 = sphi 0, %s17
    %s31 = sphi 0, %s33
    %s34 = sphi 0, %s31
    %s35 = sphi 0, %s34
    %s51 = sphi 0, %s35
    %s59 = sphi 0, %s61
    %s62 = sphi 0, %s59
    %s63 = sphi 0, %s62
    %s79 = sphi 0, %s63
  $region4: #{tpu_custom_call.1} parent=0 // loop_header_branch
    %10 = sbr.rel (%p8) target = $region8
  $region5: #{tpu_custom_call.1} parent=0 // loop_body
    %s12 = ssub.s32 %s7, 1
    %s13 = ssub.s32 %s7, 2
    %s20 = sadd.s32 1, %s15
    %p21 = scmp.ge.s32.totalorder %s20, 1
    %s22 = scalar_select %p21, 0, %s20
    %s23 = sadd.s32 1, %s14
    %s24 = scalar_select %p21, %s23, %s14
    %p25 = scmp.ge.s32.totalorder %s24, 2
    %s26 = scalar_select %p25, 0, %s24
    %s27 = ssub.s32 %s14, %s26
    %s28 = ssub.s32 %s15, %s22
    %s29 = sor.u32 %s27, %s28
    %p30 = scmp.eq.s32.totalorder %s29, 0
    %s32 = sadd.s32 %s31, 1
    %s33 = scalar_select %p30, %s31, %s32
    %p36 = pneg %p30
    %p37 = scmp.eq.s32.totalorder %s7, 1
    %p38 = por %p36, %p37
    %p39 = scmp.ne.s32.totalorder %s31, %s34
    %p40 = scmp.eq.s32.totalorder %s7, 0
    %p41 = por %p39, %p40
    %p42 = scmp.ne.s32.totalorder %s31, %s34
    %p43 = scmp.eq.s32.totalorder %s12, 1
    %p44 = por %p42, %p43
    %p45 = scmp.ne.s32.totalorder %s34, %s35
    %p46 = scmp.eq.s32.totalorder %s12, 0
    %p47 = por %p45, %p46
    %p48 = scmp.ne.s32.totalorder %s34, %s35
    %p49 = scmp.eq.s32.totalorder %s13, 1
    %p50 = por %p48, %p49
    %p52 = scmp.ne.s32.totalorder %s35, %s51
    %p53 = scmp.eq.s32.totalorder %s13, 0
    %p54 = por %p52, %p53
    %s55 = ssub.s32 %s14, %s26
    %s56 = ssub.s32 %s15, %s22
    %s57 = sor.u32 %s55, %s56
    %p58 = scmp.eq.s32.totalorder %s57, 0
    %s60 = sadd.s32 %s59, 1
    %s61 = scalar_select %p58, %s59, %s60
    %p64 = pneg %p58
    %p65 = scmp.eq.s32.totalorder %s7, 1
    %p66 = por %p64, %p65
    %p67 = scmp.ne.s32.totalorder %s59, %s62
    %p68 = scmp.eq.s32.totalorder %s7, 0
    %p69 = por %p67, %p68
    %p70 = scmp.ne.s32.totalorder %s59, %s62
    %p71 = scmp.eq.s32.totalorder %s12, 1
    %p72 = por %p70, %p71
    %p73 = scmp.ne.s32.totalorder %s62, %s63
    %p74 = scmp.eq.s32.totalorder %s12, 0
    %p75 = por %p73, %p74
    %p76 = scmp.ne.s32.totalorder %s62, %s63
    %p77 = scmp.eq.s32.totalorder %s13, 1
    %p78 = por %p76, %p77
    %p80 = scmp.ne.s32.totalorder %s63, %s79
    %p81 = scmp.eq.s32.totalorder %s13, 0
    %p82 = por %p80, %p81
    %p83 = scmp.le.s32.totalorder 1, %s7
    %p84 = scmp.lt.s32.totalorder %s7, 3
    %p85 = pnand %p83, %p84
    %p86 = pneg %p85
    // Predicated region
    $region9: #{tpu_custom_call.1} parent=5 // pred_check
      _
    $region10: #{tpu_custom_call.1} parent=5 // pred_check_branch
      %88 = sbr.rel (%p85) target = $region12
    $region11: #{tpu_custom_call.1} parent=5 // pred_region
      %s89 = ssub.s32 %s7, 1
    $region12: #{tpu_custom_call.1} parent=5 // pred_fallthru
      _
    %p90 = scmp.lt.s32.totalorder %s7, 2
    // Predicated region
    $region13: #{tpu_custom_call.1} parent=5 // pred_check
      %p91 = pneg %p90
    $region14: #{tpu_custom_call.1} parent=5 // pred_check_branch
      %93 = sbr.rel (%p91) target = $region16
    $region15: #{tpu_custom_call.1} parent=5 // pred_region
      // Predicated region
      $region17: #{tpu_custom_call.1} parent=15 // pred_check
        %p94 = pneg %p41
      $region18: #{tpu_custom_call.1} parent=15 // pred_check_branch
        %96 = sbr.rel (%p94) target = $region20
      $region19: #{tpu_custom_call.1} parent=15 // pred_region
        %p97 = scmp.lt.s32.totalorder %s14, 1
        %s98 = scalar_select %p97, %s14, 1
        %p99 = scmp.lt.s32.totalorder %s15, 0
        %s100 = scalar_select %p99, %s15, 0
        %s101 = smul.addr %s98, 72
        %s102 = sadd.s32 %s100, %s101
        %s103 = smul.addr %s102, 8
        %s104 = scalar_lea.vmem %s0, %s103
      $region20: #{tpu_custom_call.1} parent=15 // pred_fallthru
        _
    $region16: #{tpu_custom_call.1} parent=5 // pred_fallthru
      _
    %p105 = scmp.le.s32.totalorder 1, %s7
    %p106 = scmp.lt.s32.totalorder %s7, 3
    %p107 = pnand %p105, %p106
    %p108 = pneg %p107
    // Predicated region
    $region21: #{tpu_custom_call.1} parent=5 // pred_check
      _
    $region22: #{tpu_custom_call.1} parent=5 // pred_check_branch
      %110 = sbr.rel (%p107) target = $region24
    $region23: #{tpu_custom_call.1} parent=5 // pred_region
      %s111 = ssub.s32 %s7, 1
      %p112 = scmp.lt.s32.totalorder %s16, 1
      %s113 = scalar_select %p112, %s16, 1
      %p114 = scmp.lt.s32.totalorder %s17, 0
      %s115 = scalar_select %p114, %s17, 0
      %s116 = smul.addr %s113, 72
      %s117 = sadd.s32 %s115, %s116
      %s118 = smul.addr %s117, 8
      %s119 = scalar_lea.vmem %s0, %s118
      %p120 = pneg %p47
      %p121 = pneg %p44
      %p122 = pneg %p75
      %p123 = pneg %p72
      %p124 = scmp.lt.s32.totalorder %s16, 1
      %s125 = scalar_select %p124, %s16, 1
      %p126 = scmp.lt.s32.totalorder %s17, 0
      %s127 = scalar_select %p126, %s17, 0
      %s128 = smul.addr %s125, 8
      %s129 = sadd.s32 %s127, %s128
      %s130 = smul.addr %s129, 8
      %s131 = scalar_lea.vmem %s1, %s130
      %p132 = scmp.lt.s32.totalorder %s16, 1
      %s133 = scalar_select %p132, %s16, 1
      %p134 = scmp.lt.s32.totalorder %s17, 0
      %s135 = scalar_select %p134, %s17, 0
      %s136 = smul.addr %s133, 72
      %s137 = sadd.s32 %s135, %s136
      %s138 = smul.addr %s137, 8
      %s139 = scalar_lea.vmem %s0, %s138
      %p140 = scmp.lt.s32.totalorder %s16, 1
      %s141 = scalar_select %p140, %s16, 1
      %p142 = scmp.lt.s32.totalorder %s17, 0
      %s143 = scalar_select %p142, %s17, 0
      %s144 = smul.addr %s141, 8
      %s145 = sadd.s32 %s143, %s144
      %s146 = smul.addr %s145, 8
      %s147 = scalar_lea.vmem %s1, %s146
      %v148 = vld [vmem:[%s139] sm:$0xff]
      %v149 = vld [vmem:[%s139 + $0x10] sm:$0xff]
      %v150 = vld [vmem:[%s139 + $0x20] sm:$0xff]
      %v151 = vld [vmem:[%s139 + $0x30] sm:$0xff]
      %v152 = vld [vmem:[%s139 + $0x40] sm:$0xff]
      %v153 = vld [vmem:[%s139 + $0x50] sm:$0xff]
      %v154 = vld [vmem:[%s139 + $0x60] sm:$0xff]
      %v155 = vld [vmem:[%s139 + $0x70] sm:$0xff]
      %s156 = scalar_lea.vmem %s139, 144
      %v157 = vld [vmem:[%s156] sm:$0xff]
      %v158 = vld [vmem:[%s156 + $0x10] sm:$0xff]
      %v159 = vld [vmem:[%s156 + $0x20] sm:$0xff]
      %v160 = vld [vmem:[%s156 + $0x30] sm:$0xff]
      %v161 = vld [vmem:[%s156 + $0x40] sm:$0xff]
      %v162 = vld [vmem:[%s156 + $0x50] sm:$0xff]
      %v163 = vld [vmem:[%s156 + $0x60] sm:$0xff]
      %v164 = vld [vmem:[%s156 + $0x70] sm:$0xff]
      %v165 = vmax.f32 %v148, %v157
      %v166 = vmax.f32 %v149, %v158
      %v167 = vmax.f32 %v150, %v159
      %v168 = vmax.f32 %v151, %v160
      %v169 = vmax.f32 %v152, %v161
      %v170 = vmax.f32 %v153, %v162
      %v171 = vmax.f32 %v154, %v163
      %v172 = vmax.f32 %v155, %v164
      %v173 = vld [vmem:[%s139 + $0x1] sm:$0xff]
      %v174 = vld [vmem:[%s139 + $0x11] sm:$0xff]
      %v175 = vld [vmem:[%s139 + $0x21] sm:$0xff]
      %v176 = vld [vmem:[%s139 + $0x31] sm:$0xff]
      %v177 = vld [vmem:[%s139 + $0x41] sm:$0xff]
      %v178 = vld [vmem:[%s139 + $0x51] sm:$0xff]
      %v179 = vld [vmem:[%s139 + $0x61] sm:$0xff]
      %v180 = vld [vmem:[%s139 + $0x71] sm:$0xff]
      %v181 = vmax.f32 %v165, %v173
      %v182 = vmax.f32 %v166, %v174
      %v183 = vmax.f32 %v167, %v175
      %v184 = vmax.f32 %v168, %v176
      %v185 = vmax.f32 %v169, %v177
      %v186 = vmax.f32 %v170, %v178
      %v187 = vmax.f32 %v171, %v179
      %v188 = vmax.f32 %v172, %v180
      %s189 = scalar_lea.vmem %s139, 288
      %v190 = vld [vmem:[%s189] sm:$0xff]
      %v191 = vld [vmem:[%s189 + $0x10] sm:$0xff]
      %v192 = vld [vmem:[%s189 + $0x20] sm:$0xff]
      %v193 = vld [vmem:[%s189 + $0x30] sm:$0xff]
      %v194 = vld [vmem:[%s189 + $0x40] sm:$0xff]
      %v195 = vld [vmem:[%s189 + $0x50] sm:$0xff]
      %v196 = vld [vmem:[%s189 + $0x60] sm:$0xff]
      %v197 = vld [vmem:[%s189 + $0x70] sm:$0xff]
      %v198 = vmax.f32 %v181, %v190
      %v199 = vmax.f32 %v182, %v191
      %v200 = vmax.f32 %v183, %v192
      %v201 = vmax.f32 %v184, %v193
      %v202 = vmax.f32 %v185, %v194
      %v203 = vmax.f32 %v186, %v195
      %v204 = vmax.f32 %v187, %v196
      %v205 = vmax.f32 %v188, %v197
      %s206 = scalar_lea.vmem %s139, 432
      %v207 = vld [vmem:[%s206] sm:$0xff]
      %v208 = vld [vmem:[%s206 + $0x10] sm:$0xff]
      %v209 = vld [vmem:[%s206 + $0x20] sm:$0xff]
      %v210 = vld [vmem:[%s206 + $0x30] sm:$0xff]
      %v211 = vld [vmem:[%s206 + $0x40] sm:$0xff]
      %v212 = vld [vmem:[%s206 + $0x50] sm:$0xff]
      %v213 = vld [vmem:[%s206 + $0x60] sm:$0xff]
      %v214 = vld [vmem:[%s206 + $0x70] sm:$0xff]
      %v215 = vmax.f32 %v198, %v207
      %v216 = vmax.f32 %v199, %v208
      %v217 = vmax.f32 %v200, %v209
      %v218 = vmax.f32 %v201, %v210
      %v219 = vmax.f32 %v202, %v211
      %v220 = vmax.f32 %v203, %v212
      %v221 = vmax.f32 %v204, %v213
      %v222 = vmax.f32 %v205, %v214
      %v223 = vld [vmem:[%s189 + $0x1] sm:$0xff]
      %v224 = vld [vmem:[%s189 + $0x11] sm:$0xff]
      %v225 = vld [vmem:[%s189 + $0x21] sm:$0xff]
      %v226 = vld [vmem:[%s189 + $0x31] sm:$0xff]
      %v227 = vld [vmem:[%s189 + $0x41] sm:$0xff]
      %v228 = vld [vmem:[%s189 + $0x51] sm:$0xff]
      %v229 = vld [vmem:[%s189 + $0x61] sm:$0xff]
      %v230 = vld [vmem:[%s189 + $0x71] sm:$0xff]
      %v231 = vmax.f32 %v215, %v223
      %v232 = vmax.f32 %v216, %v224
      %v233 = vmax.f32 %v217, %v225
      %v234 = vmax.f32 %v218, %v226
      %v235 = vmax.f32 %v219, %v227
      %v236 = vmax.f32 %v220, %v228
      %v237 = vmax.f32 %v221, %v229
      %v238 = vmax.f32 %v222, %v230
      %s239 = scalar_lea.vmem %s139, 16
      %v240 = vld [vmem:[%s239] sm:$0xff]
      %v241 = vld [vmem:[%s239 + $0x10] sm:$0xff]
      %v242 = vld [vmem:[%s239 + $0x20] sm:$0xff]
      %v243 = vld [vmem:[%s239 + $0x30] sm:$0xff]
      %v244 = vld [vmem:[%s239 + $0x40] sm:$0xff]
      %v245 = vld [vmem:[%s239 + $0x50] sm:$0xff]
      %v246 = vld [vmem:[%s239 + $0x60] sm:$0xff]
      %v247 = vld [vmem:[%s239 + $0x70] sm:$0xff]
      %v248 = vmax.f32 %v231, %v240
      %v249 = vmax.f32 %v232, %v241
      %v250 = vmax.f32 %v233, %v242
      %v251 = vmax.f32 %v234, %v243
      %v252 = vmax.f32 %v235, %v244
      %v253 = vmax.f32 %v236, %v245
      %v254 = vmax.f32 %v237, %v246
      %v255 = vmax.f32 %v238, %v247
      %s256 = scalar_lea.vmem %s139, 160
      %v257 = vld [vmem:[%s256] sm:$0xff]
      %v258 = vld [vmem:[%s256 + $0x10] sm:$0xff]
      %v259 = vld [vmem:[%s256 + $0x20] sm:$0xff]
      %v260 = vld [vmem:[%s256 + $0x30] sm:$0xff]
      %v261 = vld [vmem:[%s256 + $0x40] sm:$0xff]
      %v262 = vld [vmem:[%s256 + $0x50] sm:$0xff]
      %v263 = vld [vmem:[%s256 + $0x60] sm:$0xff]
      %v264 = vld [vmem:[%s256 + $0x70] sm:$0xff]
      %v265 = vmax.f32 %v248, %v257
      %v266 = vmax.f32 %v249, %v258
      %v267 = vmax.f32 %v250, %v259
      %v268 = vmax.f32 %v251, %v260
      %v269 = vmax.f32 %v252, %v261
      %v270 = vmax.f32 %v253, %v262
      %v271 = vmax.f32 %v254, %v263
      %v272 = vmax.f32 %v255, %v264
      %v273 = vld [vmem:[%s239 + $0x1] sm:$0xff]
      %v274 = vld [vmem:[%s239 + $0x11] sm:$0xff]
      %v275 = vld [vmem:[%s239 + $0x21] sm:$0xff]
      %v276 = vld [vmem:[%s239 + $0x31] sm:$0xff]
      %v277 = vld [vmem:[%s239 + $0x41] sm:$0xff]
      %v278 = vld [vmem:[%s239 + $0x51] sm:$0xff]
      %v279 = vld [vmem:[%s239 + $0x61] sm:$0xff]
      %v280 = vld [vmem:[%s239 + $0x71] sm:$0xff]
      %v281 = vmax.f32 %v265, %v273
      %v282 = vmax.f32 %v266, %v274
      %v283 = vmax.f32 %v267, %v275
      %v284 = vmax.f32 %v268, %v276
      %v285 = vmax.f32 %v269, %v277
      %v286 = vmax.f32 %v270, %v278
      %v287 = vmax.f32 %v271, %v279
      %v288 = vmax.f32 %v272, %v280
      %vm289 = vcmask 31744
      %290 = vst.msk [vmem:[%s147] sm:$0xff] %vm289, %v281
      %291 = vst.msk [vmem:[%s147 + $0x8] sm:$0xff] %vm289, %v282
      %292 = vst.msk [vmem:[%s147 + $0x10] sm:$0xff] %vm289, %v283
      %293 = vst.msk [vmem:[%s147 + $0x18] sm:$0xff] %vm289, %v284
      %294 = vst.msk [vmem:[%s147 + $0x20] sm:$0xff] %vm289, %v285
      %295 = vst.msk [vmem:[%s147 + $0x28] sm:$0xff] %vm289, %v286
      %296 = vst.msk [vmem:[%s147 + $0x30] sm:$0xff] %vm289, %v287
      %297 = vst.msk [vmem:[%s147 + $0x38] sm:$0xff] %vm289, %v288
      %p298 = scmp.lt.s32.totalorder %s16, 1
      %s299 = scalar_select %p298, %s16, 1
      %p300 = scmp.lt.s32.totalorder %s17, 0
      %s301 = scalar_select %p300, %s17, 0
      %s302 = smul.addr %s299, 8
      %s303 = sadd.s32 %s301, %s302
      %s304 = smul.addr %s303, 8
      %s305 = scalar_lea.vmem %s1, %s304
      // Predicated region
      $region25: #{tpu_custom_call.1} parent=23 // pred_check
        %p306 = pneg %p72
      $region26: #{tpu_custom_call.1} parent=23 // pred_check_branch
        %308 = sbr.rel (%p306) target = $region28
      $region27: #{tpu_custom_call.1} parent=23 // pred_region
        _
      $region28: #{tpu_custom_call.1} parent=23 // pred_fallthru
        _
    $region24: #{tpu_custom_call.1} parent=5 // pred_fallthru
      _
    %p309 = scmp.le.s32.totalorder 2, %s7
    // Predicated region
    $region29: #{tpu_custom_call.1} parent=5 // pred_check
      %p310 = pneg %p309
    $region30: #{tpu_custom_call.1} parent=5 // pred_check_branch
      %312 = sbr.rel (%p310) target = $region32
    $region31: #{tpu_custom_call.1} parent=5 // pred_region
      %s313 = ssub.s32 %s7, 2
      // Predicated region
      $region33: #{tpu_custom_call.1} parent=31 // pred_check
        %p314 = pneg %p78
      $region34: #{tpu_custom_call.1} parent=31 // pred_check_branch
        %316 = sbr.rel (%p314) target = $region36
      $region35: #{tpu_custom_call.1} parent=31 // pred_region
        %p317 = scmp.lt.s32.totalorder %s18, 1
        %s318 = scalar_select %p317, %s18, 1
        %p319 = scmp.lt.s32.totalorder %s19, 0
        %s320 = scalar_select %p319, %s19, 0
        %s321 = smul.addr %s318, 8
        %s322 = sadd.s32 %s320, %s321
        %s323 = smul.addr %s322, 8
        %s324 = scalar_lea.vmem %s1, %s323
      $region36: #{tpu_custom_call.1} parent=31 // pred_fallthru
        _
    $region32: #{tpu_custom_call.1} parent=5 // pred_fallthru
      _
  $region6: #{tpu_custom_call.1} parent=0 // loop_footer
    %s11 = sadd.s32 1, %s7
  $region7: #{tpu_custom_call.1} parent=0 // loop_footer_branch
    %6 = sbr.rel target = $region3
  $region8: #{tpu_custom_call.1} parent=0 // loop_exit
    _

</llo_original>
